<compile_context>
chip_gen: v5e
topology: v5e:2x2
jax: 0.10.0
libtpu: 0.0.40
codegen_flags: <defaults>
</compile_context>

<pallas_src>
import functools
import math

import jax
import jax.numpy as jnp
from jax.experimental import pallas as pl
from jax.experimental.pallas import tpu as pltpu


# ----------------------------------------------------------------------------
# Scaled-down architecture config (B4-like structure, toy sizes).
# ----------------------------------------------------------------------------
STEM_C = 16
# (in_channels, out_channels, expand_ratio); all block strides are 1 here.
BLOCK_CFG = [
    (16, 16, 1),
    (16, 24, 4),
    (24, 24, 4),   # <- attention is applied after this block
    (24, 24, 4),
]
ATT_BLOCK_IDX = 2
ATT_WIDTH = 1      # width > 0 branch of init_att (conv3x3+ReLU stack, then 1x1)
HEAD_C = 64
SE_RATIO = 0.25
BN_EPS = 1e-3

LANE = 128                 # pad all channel dims to the 128-lane width
_ACT_DTYPE = jnp.bfloat16  # activations / MXU operands; accumulate in f32
_HALO_COL = 8              # sublane-aligned column offset of the data block in
                           # the in-VMEM halo scratch (f32 sublane tile = 8)


def _ceil_to(n, m=LANE):
    return ((n + m - 1) // m) * m


def _pad2(a, rows, cols):
    r, c = a.shape
    return jnp.pad(a, ((0, rows - r), (0, cols - c)))


@functools.lru_cache(maxsize=None)
def _vmem_limit_bytes():
    """64 MiB scoped budget on 128-MiB-VMEM chips (v5e/v6e), 32 MiB on v7x."""
    try:
        cap = getattr(pltpu.get_tpu_info(), "vmem_capacity_bytes", 0)
    except Exception:
        cap = 0
    return (64 if cap >= 128 * 1024 * 1024 else 32) * 1024 * 1024


def _compiler_params(sem):
    return pltpu.CompilerParams(dimension_semantics=sem,
                                vmem_limit_bytes=_vmem_limit_bytes())


def _choose_tile(dim, candidates, prefer_grid_ge=1):
    """Largest candidate that divides `dim`, preferring a grid extent >=
    prefer_grid_ge (keeps both v7x TensorCores busy); falls back to `dim`."""
    divs = [c for c in candidates if dim % c == 0]
    if not divs:
        return dim
    pref = [c for c in divs if dim // c >= prefer_grid_ge]
    return max(pref) if pref else max(divs)


def _apply_act(y, act):
    if act == "swish":
        return y * jax.nn.sigmoid(y)
    if act == "relu":
        return jnp.maximum(y, 0.0)
    return y


# ----------------------------------------------------------------------------
# Pallas kernels
# ----------------------------------------------------------------------------
def _mm_kernel(x_ref, w_ref, scale_ref, shift_ref, *rest, act, has_res):
    """Tiled o = act((x @ w) * scale + shift [+ residual]); K is the last
    ('arbitrary') grid axis, residual is fused into the epilogue."""
    if has_res:
        res_ref, o_ref, acc_ref = rest
    else:
        o_ref, acc_ref = rest
    k = pl.program_id(2)

    @pl.when(k == 0)
    def _():
        acc_ref[...] = jnp.zeros_like(acc_ref)

    acc_ref[...] += jnp.dot(x_ref[...], w_ref[...],
                            preferred_element_type=jnp.float32)

    @pl.when(k == pl.num_programs(2) - 1)
    def _():
        y = acc_ref[...] * scale_ref[...] + shift_ref[...]
        if has_res:
            y = y + res_ref[...].astype(jnp.float32)
        o_ref[...] = _apply_act(y, act).astype(o_ref.dtype)


def fused_matmul(x, w, scale, shift, act="none", residual=None):
    """act((x @ w) * scale + shift [+ residual]), tiled over (M, N, K) with an
    f32 VMEM accumulator.  M is padded when no clean tile divides it."""
    M, K = x.shape
    N = w.shape[1]
    Mp = max(64, _ceil_to(M, 64))
    if Mp != M:   # robust fallback for non-divisible row counts (real resolutions)
        x = jnp.pad(x, ((0, Mp - M), (0, 0)))
        if residual is not None:
            residual = jnp.pad(residual, ((0, Mp - M), (0, 0)))
    tm = _choose_tile(Mp, (512, 256, 128, 64), prefer_grid_ge=2)
    tn = _choose_tile(N, (512, 256, 128))
    tk = _choose_tile(K, (1024, 512, 256, 128))
    grid = (Mp // tm, N // tn, K // tk)
    has_res = residual is not None
    in_specs = [
        pl.BlockSpec((tm, tk), lambda i, j, k: (i, k)),
        pl.BlockSpec((tk, tn), lambda i, j, k: (k, j)),
        pl.BlockSpec((1, tn), lambda i, j, k: (0, j)),
        pl.BlockSpec((1, tn), lambda i, j, k: (0, j)),
    ]
    args = [x, w, scale, shift]
    if has_res:
        in_specs.append(pl.BlockSpec((tm, tn), lambda i, j, k: (i, j)))
        args.append(residual)
    out = pl.pallas_call(
        functools.partial(_mm_kernel, act=act, has_res=has_res),
        out_shape=jax.ShapeDtypeStruct((Mp, N), _ACT_DTYPE),
        grid=grid,
        in_specs=in_specs,
        out_specs=pl.BlockSpec((tm, tn), lambda i, j, k: (i, j)),
        scratch_shapes=[pltpu.VMEM((tm, tn), jnp.float32)],
        compiler_params=_compiler_params(("parallel", "parallel", "arbitrary")),
    )(*args)
    return out[:M] if Mp != M else out


def _dw_se_kernel(x_ref, w_ref, scale_ref, shift_ref, w1_ref, b1_ref, w2_ref,
                  b2_ref, o_ref, xpad_ref, *, H, W):
    """Depthwise 3x3 (stride 1) + folded BN + swish with the squeeze-excite gate
    computed AND applied in-kernel while the activation is VMEM-resident.
    The 1-pixel halo lives in a VMEM scratch (no HBM pad); the bf16->f32 upcast
    of the input happens exactly once (hoisted out of the 9-tap loop)."""
    C = o_ref.shape[-1]
    xpad_ref[...] = jnp.zeros_like(xpad_ref)
    # aligned interior placement (column offset = f32 sublane tile) -> clean store
    xpad_ref[1:H + 1, _HALO_COL:_HALO_COL + W, :] = x_ref[0].astype(jnp.float32)

    w = w_ref[...].astype(jnp.float32)                        # (9, C) bf16 -> f32
    acc = jnp.zeros((H, W, C), jnp.float32)
    for di in range(3):
        for dj in range(3):
            tap = di * 3 + dj
            win = xpad_ref[di:di + H,
                           _HALO_COL - 1 + dj:_HALO_COL - 1 + dj + W, :]
            acc = acc + win * w[tap:tap + 1, :]
    y = acc * scale_ref[...] + shift_ref[...]
    y = y * jax.nn.sigmoid(y)                                  # swish

    # squeeze-excite: squeeze -> reduce -> swish -> expand -> sigmoid gate.
    pooled = jnp.mean(y, axis=(0, 1), keepdims=True)[0]        # (1, C)
    s = jnp.dot(pooled, w1_ref[...].astype(jnp.float32),
                preferred_element_type=jnp.float32) + b1_ref[...]
    s = s * jax.nn.sigmoid(s)
    g = jnp.dot(s, w2_ref[...].astype(jnp.float32),
                preferred_element_type=jnp.float32) + b2_ref[...]
    g = jax.nn.sigmoid(g)                                      # (1, C)
    # INVARIANT: padded channels of y are exactly zero (padded weights / scale /
    # shift are zero), so g == 0.5 on padded lanes is harmless: y * g stays zero.
    o_ref[0] = (y * g).astype(o_ref.dtype)


def dwconv_bn_swish_se(x, w9c, scale, shift, se_w1, se_b1, se_w2, se_b2):
    B, H, W, C = x.shape
    Cse = se_w1.shape[1]
    # TODO(synk): at real resolutions, tile over H with a two-pass pool/gate
    # structure so per-step blocks fit v7x's 64 MiB VMEM; toy maps fit in one block.
    return pl.pallas_call(
        functools.partial(_dw_se_kernel, H=H, W=W),
        out_shape=jax.ShapeDtypeStruct((B, H, W, C), _ACT_DTYPE),
        grid=(B,),
        in_specs=[
            pl.BlockSpec((1, H, W, C), lambda b: (b, 0, 0, 0)),
            pl.BlockSpec((9, C), lambda b: (0, 0)),
            pl.BlockSpec((1, C), lambda b: (0, 0)),
            pl.BlockSpec((1, C), lambda b: (0, 0)),
            pl.BlockSpec((C, Cse), lambda b: (0, 0)),
            pl.BlockSpec((1, Cse), lambda b: (0, 0)),
            pl.BlockSpec((Cse, C), lambda b: (0, 0)),
            pl.BlockSpec((1, C), lambda b: (0, 0)),
        ],
        out_specs=pl.BlockSpec((1, H, W, C), lambda b: (b, 0, 0, 0)),
        scratch_shapes=[pltpu.VMEM((H + 2, W + 16, C), jnp.float32)],
        compiler_params=_compiler_params(("parallel",)),
    )(x, w9c, scale, shift, se_w1, se_b1, se_w2, se_b2)


def _att3x3_kernel(x_ref, w_ref, b_ref, *rest, H, W, with_gate):
    """Dense 3x3 conv (pad 1) as ONE MXU dot over an in-VMEM im2col (K = 9*Cin,
    fills the 256-deep MXU on v6e/v7x), + bias + ReLU.  When `with_gate`, the
    final 1x1 attention conv + sigmoid is fused as a lane reduction and the
    kernel emits x * att.  The 1-pixel halo lives in VMEM scratch (no HBM pad)."""
    if with_gate:
        xg_ref, gw_ref, gb_ref, o_ref, xpad_ref = rest
    else:
        o_ref, xpad_ref = rest
    Cin = x_ref.shape[-1]
    Cout = w_ref.shape[-1]
    xpad_ref[...] = jnp.zeros_like(xpad_ref)
    xpad_ref[1:H + 1, _HALO_COL:_HALO_COL + W, :] = x_ref[0].astype(jnp.float32)

    cols = [xpad_ref[di:di + H, _HALO_COL - 1 + dj:_HALO_COL - 1 + dj + W, :]
            for di in range(3) for dj in range(3)]
    patches = jnp.concatenate(cols, axis=-1).reshape(H * W, 9 * Cin)
    h = jnp.dot(patches.astype(_ACT_DTYPE), w_ref[...],
                preferred_element_type=jnp.float32)            # (H*W, Cout)
    h = jnp.maximum(h + b_ref[...], 0.0)
    if with_gate:
        att = jax.nn.sigmoid(
            jnp.sum(h * gw_ref[...].astype(jnp.float32), axis=-1, keepdims=True)
            + gb_ref[...])                                     # (H*W, 1)
        xg = xg_ref[0].reshape(H * W, Cin).astype(jnp.float32)
        o_ref[0] = (xg * att).reshape(H, W, Cin).astype(o_ref.dtype)
    else:
        o_ref[0] = h.reshape(H, W, Cout).astype(o_ref.dtype)


def att_conv3x3(h, w9, b, gate=None):
    B, H, W, C = h.shape
    with_gate = gate is not None
    in_specs = [
        pl.BlockSpec((1, H, W, C), lambda bb: (bb, 0, 0, 0)),
        pl.BlockSpec(w9.shape, lambda bb: (0, 0)),
        pl.BlockSpec((1, C), lambda bb: (0, 0)),
    ]
    args = [h, w9, b]
    if with_gate:
        xg, gw, gb = gate
        in_specs += [
            pl.BlockSpec((1, H, W, C), lambda bb: (bb, 0, 0, 0)),
            pl.BlockSpec((1, C), lambda bb: (0, 0)),
            pl.BlockSpec((1, 1), lambda bb: (0, 0)),
        ]
        args += [xg, gw, gb]
    # TODO(synk): tile over H (re-fetching the 1-row halo) for large feature maps.
    return pl.pallas_call(
        functools.partial(_att3x3_kernel, H=H, W=W, with_gate=with_gate),
        out_shape=jax.ShapeDtypeStruct((B, H, W, C), _ACT_DTYPE),
        grid=(B,),
        in_specs=in_specs,
        out_specs=pl.BlockSpec((1, H, W, C), lambda bb: (bb, 0, 0, 0)),
        scratch_shapes=[pltpu.VMEM((H + 2, W + 16, C), jnp.float32)],
        compiler_params=_compiler_params(("parallel",)),
    )(*args)


def _pool_fc_kernel(x_ref, w_ref, b_ref, o_ref):
    """Global average pool + Linear(C, 1) as a lane reduction (no N=1 matmul)."""
    pooled = jnp.mean(x_ref[...].astype(jnp.float32), axis=1)    # (B, C)
    o_ref[...] = jnp.sum(pooled * w_ref[...], axis=-1, keepdims=True) + b_ref[...]


def pool_classifier(x, w_row, b):
    B, H, W, C = x.shape
    # Head feature map is tiny; a single VMEM-resident block is fine.
    return pl.pallas_call(
        _pool_fc_kernel,
        out_shape=jax.ShapeDtypeStruct((B, 1), jnp.float32),
        in_specs=[pl.BlockSpec(memory_space=pltpu.MemorySpace.VMEM)] * 3,
        out_specs=pl.BlockSpec(memory_space=pltpu.MemorySpace.VMEM),
    )(x.reshape(B, H * W, C), w_row, b)


# ----------------------------------------------------------------------------
# Conv wrappers / model pieces
# ----------------------------------------------------------------------------
def _im2col_3x3(x, stride):
    """Used only for the stem (Cin=3 -> K=27, blow-up negligible, runs once)."""
    B, H, W, C = x.shape
    xp = jnp.pad(x, ((0, 0), (1, 1), (1, 1), (0, 0)))
    Ho = (H + 2 - 3) // stride + 1
    Wo = (W + 2 - 3) // stride + 1
    cols = []
    for di in range(3):
        for dj in range(3):
            cols.append(
                xp[:, di:di + (Ho - 1) * stride + 1:stride,
                      dj:dj + (Wo - 1) * stride + 1:stride, :])
    patches = jnp.concatenate(cols, axis=-1)                     # (B, Ho, Wo, 9C)
    return patches.reshape(B * Ho * Wo, 9 * C), Ho, Wo


def conv1x1(x, w2d, scale, shift, act="none", residual=None):
    B, H, W, C = x.shape
    N = w2d.shape[1]
    res2d = None if residual is None else residual.reshape(B * H * W, N)
    y = fused_matmul(x.reshape(B * H * W, C), w2d, scale, shift, act=act,
                     residual=res2d)
    return y.reshape(B, H, W, N)


def mbconv(x, bp):
    inputs = x
    if bp["expand"]:
        x = conv1x1(x, bp["expand_w2d"], bp["expand_scale"], bp["expand_shift"],
                    act="swish")
    x = dwconv_bn_swish_se(x, bp["dw_w"], bp["dw_scale"], bp["dw_shift"],
                           bp["se_w1"], bp["se_b1"], bp["se_w2"], bp["se_b2"])
    res = inputs if bp["skip"] else None     # drop_connect is identity in eval
    return conv1x1(x, bp["proj_w2d"], bp["proj_scale"], bp["proj_shift"],
                   act="none", residual=res)


def apply_attention(x, ap):
    # attconv = width * [conv3x3 + ReLU] then conv1x1; x = x * sigmoid(attconv(x))
    hidden = ap["hidden"]
    h = x
    for (w9, b) in hidden[:-1]:
        h = att_conv3x3(h, w9, b)
    w9, b = hidden[-1]
    return att_conv3x3(h, w9, b, gate=(x, ap["out_w"], ap["out_b"]))


def forward(params, x_nchw):
    x = jnp.transpose(x_nchw, (0, 2, 3, 1)).astype(_ACT_DTYPE)   # NCHW -> NHWC
    B = x.shape[0]
    # stem conv (3x3, stride 2, pad 1) + BN + swish
    patches, Ho, Wo = _im2col_3x3(x, stride=2)
    x = fused_matmul(patches, params["stem_w2d"], params["stem_scale"],
                     params["stem_shift"], act="swish").reshape(B, Ho, Wo, -1)
    # MBConv blocks; attention applied after att_block_idx
    for idx, bp in enumerate(params["blocks"]):
        x = mbconv(x, bp)
        if idx == params["att_block_idx"]:
            x = apply_attention(x, params["attconv"])
    # conv_head + BN + swish
    x = conv1x1(x, params["head_w2d"], params["head_scale"], params["head_shift"],
                act="swish")
    # avg pool + flatten + dropout (eval: identity) + Linear(head_c, 1)
    return pool_classifier(x, params["cls_w"], params["cls_b"])


# ----------------------------------------------------------------------------
# Deterministic synthetic parameters (channel dims zero-padded to 128 lanes)
# ----------------------------------------------------------------------------
def build_params(seed=0):
    root = jax.random.PRNGKey(seed)
    counter = [0]

    def nk():
        counter[0] += 1
        return jax.random.fold_in(root, counter[0])

    def conv_w(cout, cin, k):
        fan_in = cin * k * k
        return jax.random.normal(nk(), (cout, cin, k, k), jnp.float32) / math.sqrt(fan_in)

    def bias_row(c, cpad):
        b = 0.01 * jax.random.normal(nk(), (1, c), jnp.float32)
        return _pad2(b, 1, cpad)

    def bn_fold(c, cpad):
        gamma = 1.0 + 0.1 * jax.random.normal(nk(), (c,), jnp.float32)
        beta = 0.05 * jax.random.normal(nk(), (c,), jnp.float32)
        mean = 0.05 * jax.random.normal(nk(), (c,), jnp.float32)
        var = 1.0 + 0.1 * jax.random.uniform(nk(), (c,), jnp.float32)
        scale = gamma / jnp.sqrt(var + BN_EPS)
        shift = beta - mean * scale
        return (_pad2(scale.reshape(1, c), 1, cpad),
                _pad2(shift.reshape(1, c), 1, cpad))

    def w1x1(cout, cin):
        w = jnp.transpose(conv_w(cout, cin, 1).reshape(cout, cin))   # (cin, cout)
        return _pad2(w, _ceil_to(cin), _ceil_to(cout)).astype(_ACT_DTYPE)

    params = {"att_block_idx": ATT_BLOCK_IDX}

    # stem
    w = conv_w(STEM_C, 3, 3)
    w2d = jnp.transpose(w, (2, 3, 1, 0)).reshape(9 * 3, STEM_C)      # tap-major rows
    params["stem_w2d"] = _pad2(w2d, 9 * 3, _ceil_to(STEM_C)).astype(_ACT_DTYPE)
    params["stem_scale"], params["stem_shift"] = bn_fold(STEM_C, _ceil_to(STEM_C))

    # MBConv blocks
    blocks = []
    for (cin, cout, e) in BLOCK_CFG:
        mid = cin * e
        midp = _ceil_to(mid)
        se_c = max(1, int(cin * SE_RATIO))
        bp = {"expand": e != 1, "skip": cin == cout}
        if bp["expand"]:
            bp["expand_w2d"] = w1x1(mid, cin)
            bp["expand_scale"], bp["expand_shift"] = bn_fold(mid, midp)
        dw = jnp.transpose(conv_w(mid, 1, 3).reshape(mid, 9))        # (9, mid)
        bp["dw_w"] = _pad2(dw, 9, midp).astype(_ACT_DTYPE)           # bf16, upcast in-kernel
        bp["dw_scale"], bp["dw_shift"] = bn_fold(mid, midp)
        bp["se_w1"] = _pad2(
            jnp.transpose(conv_w(se_c, mid, 1).reshape(se_c, mid)),
            midp, se_c).astype(_ACT_DTYPE)
        bp["se_b1"] = bias_row(se_c, se_c)
        bp["se_w2"] = _pad2(
            jnp.transpose(conv_w(mid, se_c, 1).reshape(mid, se_c)),
            se_c, midp).astype(_ACT_DTYPE)
        bp["se_b2"] = bias_row(mid, midp)
        bp["proj_w2d"] = w1x1(cout, mid)
        bp["proj_scale"], bp["proj_shift"] = bn_fold(cout, _ceil_to(cout))
        blocks.append(bp)
    params["blocks"] = blocks

    # attconv (width > 0 branch): width * [conv3x3 + ReLU] then conv1x1 -> sigmoid
    # TODO(synk): width == 0 (single 1x1 attconv) path is not instantiated here.
    c_att = BLOCK_CFG[ATT_BLOCK_IDX][1]
    catp = _ceil_to(c_att)
    att = {"hidden": []}
    for _ in range(ATT_WIDTH):
        wt = conv_w(c_att, c_att, 3)                                 # (cout, cin, 3, 3)
        taps = [_pad2(jnp.transpose(wt[:, :, di, dj]), catp, catp)
                for di in range(3) for dj in range(3)]
        w9 = jnp.concatenate(taps, axis=0).astype(_ACT_DTYPE)        # (9*catp, catp)
        att["hidden"].append((w9, bias_row(c_att, catp)))
    att["out_w"] = _pad2(conv_w(1, c_att, 1).reshape(1, c_att), 1,
                         catp).astype(_ACT_DTYPE)
    att["out_b"] = 0.01 * jax.random.normal(nk(), (1, 1), jnp.float32)
    params["attconv"] = att

    # conv_head + classifier
    c_head_in = BLOCK_CFG[-1][1]
    params["head_w2d"] = w1x1(HEAD_C, c_head_in)
    params["head_scale"], params["head_shift"] = bn_fold(HEAD_C, _ceil_to(HEAD_C))
    params["cls_w"] = _pad2(
        jax.random.normal(nk(), (1, HEAD_C), jnp.float32) / math.sqrt(HEAD_C),
        1, _ceil_to(HEAD_C))
    params["cls_b"] = 0.01 * jax.random.normal(nk(), (1, 1), jnp.float32)
    return params


if __name__ == "__main__":
    params = build_params(seed=0)
    x = jax.random.normal(jax.random.PRNGKey(0), (2, 3, 16, 16), jnp.float32)  # NCHW
    out = forward(params, x)
    out = jax.block_until_ready(out)
    assert out.shape == (2, 1), out.shape
    assert bool(jnp.all(jnp.isfinite(out)))
    print("KERNEL_OK")
</pallas_src>

<mosaic_0001>
module attributes {stable_mosaic.version = 11 : i64} {
  func.func @_mm_kernel(%arg0: i32, %arg1: i32, %arg2: i32, %arg3: memref<64x27xbf16, #tpu.memory_space<vmem>>, %arg4: memref<27x128xbf16, #tpu.memory_space<vmem>>, %arg5: memref<1x128xf32, #tpu.memory_space<vmem>>, %arg6: memref<1x128xf32, #tpu.memory_space<vmem>>, %arg7: memref<64x128xbf16, #tpu.memory_space<vmem>>, %arg8: memref<64x128xf32, #tpu.memory_space<vmem>>) attributes {dimension_semantics = [#tpu.dimension_semantics<parallel>, #tpu.dimension_semantics<parallel>, #tpu.dimension_semantics<arbitrary>], iteration_bounds = array<i64: 2, 1, 1>, scalar_prefetch = 0 : i64, scratch_operands = 1 : i64, tpu.core_type = #tpu.core_type<tc>, window_params = [{transform_indices = @transform_0, window_bounds = array<i64: 64, 27>}, {transform_indices = @transform_1, window_bounds = array<i64: 27, 128>}, {transform_indices = @transform_2, window_bounds = array<i64: 1, 128>}, {transform_indices = @transform_3, window_bounds = array<i64: 1, 128>}, {transform_indices = @transform_4, window_bounds = array<i64: 64, 128>}]} {
    %c0_i32 = arith.constant 0 : i32
    %0 = arith.cmpi eq, %arg2, %c0_i32 : i32
    %1 = arith.extui %0 : i1 to i32
    %c0_i32_0 = arith.constant 0 : i32
    %2 = arith.cmpi ne, %1, %c0_i32_0 : i32
    scf.if %2 {
      %cst_10 = arith.constant 0.000000e+00 : f32
      %12 = vector.broadcast %cst_10 : f32 to vector<64x128xf32>
      %c0_11 = arith.constant 0 : index
      %c0_12 = arith.constant 0 : index
      %13 = vector.load %arg8[%c0_11, %c0_12] : memref<64x128xf32, #tpu.memory_space<vmem>>, vector<64x128xf32>
      tpu.vector_store %arg8[%c0_11, %c0_12], %12 {strides = array<i32>} : memref<64x128xf32, #tpu.memory_space<vmem>>, vector<64x128xf32>,
    } else {
    }
    %c0 = arith.constant 0 : index
    %c0_1 = arith.constant 0 : index
    %3 = vector.load %arg8[%c0, %c0_1] : memref<64x128xf32, #tpu.memory_space<vmem>>, vector<64x128xf32>
    %c0_2 = arith.constant 0 : index
    %c0_3 = arith.constant 0 : index
    %4 = vector.load %arg3[%c0_2, %c0_3] : memref<64x27xbf16, #tpu.memory_space<vmem>>, vector<64x27xbf16>
    %c0_4 = arith.constant 0 : index
    %c0_5 = arith.constant 0 : index
    %5 = vector.load %arg4[%c0_4, %c0_5] : memref<27x128xbf16, #tpu.memory_space<vmem>>, vector<27x128xbf16>
    %cst = arith.constant dense<0.000000e+00> : vector<64x128xf32>
    %6 = tpu.matmul %4, %5, %cst {dimension_numbers = #tpu.dot_dimension_numbers<[1], [0], [0], [1], [0, 0, 1, 1], [], []>} : vector<64x27xbf16>, vector<27x128xbf16>, vector<64x128xf32> -> vector<64x128xf32>
    %7 = arith.addf %3, %6 : vector<64x128xf32>
    %c0_6 = arith.constant 0 : index
    %c0_7 = arith.constant 0 : index
    %8 = vector.load %arg8[%c0_6, %c0_7] : memref<64x128xf32, #tpu.memory_space<vmem>>, vector<64x128xf32>
    tpu.vector_store %arg8[%c0_6, %c0_7], %7 {strides = array<i32>} : memref<64x128xf32, #tpu.memory_space<vmem>>, vector<64x128xf32>,
    %c0_i32_8 = arith.constant 0 : i32
    %9 = arith.cmpi eq, %arg2, %c0_i32_8 : i32
    %10 = arith.extui %9 : i1 to i32
    %c0_i32_9 = arith.constant 0 : i32
    %11 = arith.cmpi ne, %10, %c0_i32_9 : i32
    scf.if %11 {
      %c0_10 = arith.constant 0 : index
      %c0_11 = arith.constant 0 : index
      %12 = vector.load %arg8[%c0_10, %c0_11] : memref<64x128xf32, #tpu.memory_space<vmem>>, vector<64x128xf32>
      %c0_12 = arith.constant 0 : index
      %c0_13 = arith.constant 0 : index
      %13 = vector.load %arg5[%c0_12, %c0_13] : memref<1x128xf32, #tpu.memory_space<vmem>>, vector<1x128xf32>
      %14 = vector.broadcast %13 : vector<1x128xf32> to vector<64x128xf32>
      %15 = arith.mulf %12, %14 : vector<64x128xf32>
      %c0_14 = arith.constant 0 : index
      %c0_15 = arith.constant 0 : index
      %16 = vector.load %arg6[%c0_14, %c0_15] : memref<1x128xf32, #tpu.memory_space<vmem>>, vector<1x128xf32>
      %17 = vector.broadcast %16 : vector<1x128xf32> to vector<64x128xf32>
      %18 = arith.addf %15, %17 : vector<64x128xf32>
      %19 = arith.negf %18 : vector<64x128xf32>
      %20 = math.exp %19 : vector<64x128xf32>
      %cst_16 = arith.constant 1.000000e+00 : f32
      %21 = vector.broadcast %cst_16 : f32 to vector<64x128xf32>
      %22 = arith.addf %21, %20 : vector<64x128xf32>
      %23 = arith.divf %21, %22 : vector<64x128xf32>
      %24 = arith.mulf %18, %23 : vector<64x128xf32>
      %25 = arith.truncf %24 : vector<64x128xf32> to vector<64x128xbf16>
      %c0_17 = arith.constant 0 : index
      %c0_18 = arith.constant 0 : index
      %26 = vector.load %arg7[%c0_17, %c0_18] : memref<64x128xbf16, #tpu.memory_space<vmem>>, vector<64x128xbf16>
      tpu.vector_store %arg7[%c0_17, %c0_18], %25 {strides = array<i32>} : memref<64x128xbf16, #tpu.memory_space<vmem>>, vector<64x128xbf16>,
    } else {
    }
    return
  }
  func.func @transform_0(%arg0: i32, %arg1: i32, %arg2: i32) -> (i32, i32) {
    %c0_i32 = arith.constant 0 : i32
    return %arg0, %arg2 : i32, i32
  }
  func.func @transform_1(%arg0: i32, %arg1: i32, %arg2: i32) -> (i32, i32) {
    %c0_i32 = arith.constant 0 : i32
    return %arg2, %arg1 : i32, i32
  }
  func.func @transform_2(%arg0: i32, %arg1: i32, %arg2: i32) -> (i32, i32) {
    %c0_i32 = arith.constant 0 : i32
    %c0_i32_0 = arith.constant 0 : i32
    return %c0_i32, %arg1 : i32, i32
  }
  func.func @transform_3(%arg0: i32, %arg1: i32, %arg2: i32) -> (i32, i32) {
    %c0_i32 = arith.constant 0 : i32
    %c0_i32_0 = arith.constant 0 : i32
    return %c0_i32, %arg1 : i32, i32
  }
  func.func @transform_4(%arg0: i32, %arg1: i32, %arg2: i32) -> (i32, i32) {
    %c0_i32 = arith.constant 0 : i32
    return %arg0, %arg1 : i32, i32
  }
}

</mosaic_0001>

<llo_original>
// kernel: tpu_custom_call.1
$region0: #{tpu_custom_call.1}
  #allocation0 [shape = 'u32[]', space=smem, size = 0x4, offset = 0x4, fixed_abs, tag = 'smem constant byte address 0x4 - core index']
  #allocation1 [shape = 'u32[72,128]{1,0:T(1,128)}', space=vmem, size = 0x9000, scoped, tag = 'internal scratch']
  #allocation2 [shape = 'f32[64,128]{1,0:T(8,128)}', space=vmem, size = 0x8000, scoped, tag = 'scratch operand']
  %s0 = inlined_call_operand.vmem [shape: bf16[128,27], index: 0, kind: input, shape index: {}]
  %s1 = inlined_call_operand.vmem [shape: bf16[27,128], index: 1, kind: input, shape index: {}]
  %s2 = inlined_call_operand.vmem [shape: f32[1,128], index: 2, kind: input, shape index: {}]
  %s3 = inlined_call_operand.vmem [shape: f32[1,128], index: 3, kind: input, shape index: {}]
  %s4 = inlined_call_operand.hbm [shape: bf16[128,128], index: 4, kind: output, shape index: {}]
  %s5 = sld [smem:[#allocation0]]
  $region57: #{tpu_custom_call.1} parent=0
    _
  %s7 = ssub.s32 1, %s5
  %s8 = scalar_select 0, %s7, %s5
  $region1: #{tpu_custom_call.1} parent=0
    #allocation3 [shape = 'u8[32768]{0}', space=vmem, size = 0x8000, scoped, tag = 'output window, operand 0']
    #allocation4 [shape = 's32[2]{0}', space=sflag, size = 0x8, scoped, tag = 'scoped memory for tpu_custom_call.1']
    %9 = vsyncpa [#allocation4], 0
    %s10 = scalar_lea.sflag [#allocation4], 1
    %11 = vsyncpa %s10, 0
    loop: start=0, step=1, limit=4
    $region2: #{tpu_custom_call.1} parent=1 // loop_pre_header
      _
    $region3: #{tpu_custom_call.1} parent=1 // loop_header
      %s13 = sphi 0, %s17
      %p14 = scmp.ge.s32.totalorder %s13, 4
      %s20 = sphi 0, %s39
      %s21 = sphi 0, %s35
      %s22 = sphi 0, %s31
      %s23 = sphi 0, %s20
      %s24 = sphi 0, %s21
      %s25 = sphi 0, %s22
      %s26 = sphi 0, %s23
      %s27 = sphi 0, %s24
      %s28 = sphi 0, %s25
      %s44 = sphi 0, %s46
      %s47 = sphi 0, %s44
      %s48 = sphi 0, %s47
      %s64 = sphi 0, %s48
      %s72 = sphi 0, %s74
      %s75 = sphi 0, %s72
      %s76 = sphi 0, %s75
      %s92 = sphi 0, %s76
      %s98 = sphi 0, %s100
      %s101 = sphi 0, %s98
      %s102 = sphi 0, %s101
      %s118 = sphi 0, %s102
      %s124 = sphi 0, %s126
      %s127 = sphi 0, %s124
      %s128 = sphi 0, %s127
      %s144 = sphi 0, %s128
      %s152 = sphi 0, %s154
      %s155 = sphi 0, %s152
      %s156 = sphi 0, %s155
      %s172 = sphi 0, %s156
    $region4: #{tpu_custom_call.1} parent=1 // loop_header_branch
      %16 = sbr.rel (%p14) target = $region8
    $region5: #{tpu_custom_call.1} parent=1 // loop_body
      %s18 = ssub.s32 %s13, 1
      %s19 = ssub.s32 %s13, 2
      %s29 = sadd.s32 1, %s22
      %p30 = scmp.ge.s32.totalorder %s29, 1
      %s31 = scalar_select %p30, 0, %s29
      %s32 = sadd.s32 1, %s21
      %s33 = scalar_select %p30, %s32, %s21
      %p34 = scmp.ge.s32.totalorder %s33, 1
      %s35 = scalar_select %p34, 0, %s33
      %s36 = sadd.s32 1, %s20
      %s37 = scalar_select %p34, %s36, %s20
      %p38 = scmp.ge.s32.totalorder %s37, 2
      %s39 = scalar_select %p38, 0, %s37
      %s40 = ssub.s32 %s20, %s39
      %s41 = ssub.s32 %s22, %s31
      %s42 = sor.u32 %s40, %s41
      %p43 = scmp.eq.s32.totalorder %s42, 0
      %s45 = sadd.s32 %s44, 1
      %s46 = scalar_select %p43, %s44, %s45
      %p49 = pneg %p43
      %p50 = scmp.eq.s32.totalorder %s13, 1
      %p51 = por %p49, %p50
      %p52 = scmp.ne.s32.totalorder %s44, %s47
      %p53 = scmp.eq.s32.totalorder %s13, 0
      %p54 = por %p52, %p53
      %p55 = scmp.ne.s32.totalorder %s44, %s47
      %p56 = scmp.eq.s32.totalorder %s18, 1
      %p57 = por %p55, %p56
      %p58 = scmp.ne.s32.totalorder %s47, %s48
      %p59 = scmp.eq.s32.totalorder %s18, 0
      %p60 = por %p58, %p59
      %p61 = scmp.ne.s32.totalorder %s47, %s48
      %p62 = scmp.eq.s32.totalorder %s19, 1
      %p63 = por %p61, %p62
      %p65 = scmp.ne.s32.totalorder %s48, %s64
      %p66 = scmp.eq.s32.totalorder %s19, 0
      %p67 = por %p65, %p66
      %s68 = ssub.s32 %s22, %s31
      %s69 = ssub.s32 %s21, %s35
      %s70 = sor.u32 %s68, %s69
      %p71 = scmp.eq.s32.totalorder %s70, 0
      %s73 = sadd.s32 %s72, 1
      %s74 = scalar_select %p71, %s72, %s73
      %p77 = pneg %p71
      %p78 = scmp.eq.s32.totalorder %s13, 1
      %p79 = por %p77, %p78
      %p80 = scmp.ne.s32.totalorder %s72, %s75
      %p81 = scmp.eq.s32.totalorder %s13, 0
      %p82 = por %p80, %p81
      %p83 = scmp.ne.s32.totalorder %s72, %s75
      %p84 = scmp.eq.s32.totalorder %s18, 1
      %p85 = por %p83, %p84
      %p86 = scmp.ne.s32.totalorder %s75, %s76
      %p87 = scmp.eq.s32.totalorder %s18, 0
      %p88 = por %p86, %p87
      %p89 = scmp.ne.s32.totalorder %s75, %s76
      %p90 = scmp.eq.s32.totalorder %s19, 1
      %p91 = por %p89, %p90
      %p93 = scmp.ne.s32.totalorder %s76, %s92
      %p94 = scmp.eq.s32.totalorder %s19, 0
      %p95 = por %p93, %p94
      %s96 = ssub.s32 %s21, %s35
      %p97 = scmp.eq.s32.totalorder %s96, 0
      %s99 = sadd.s32 %s98, 1
      %s100 = scalar_select %p97, %s98, %s99
      %p103 = pneg %p97
      %p104 = scmp.eq.s32.totalorder %s13, 1
      %p105 = por %p103, %p104
      %p106 = scmp.ne.s32.totalorder %s98, %s101
      %p107 = scmp.eq.s32.totalorder %s13, 0
      %p108 = por %p106, %p107
      %p109 = scmp.ne.s32.totalorder %s98, %s101
      %p110 = scmp.eq.s32.totalorder %s18, 1
      %p111 = por %p109, %p110
      %p112 = scmp.ne.s32.totalorder %s101, %s102
      %p113 = scmp.eq.s32.totalorder %s18, 0
      %p114 = por %p112, %p113
      %p115 = scmp.ne.s32.totalorder %s101, %s102
      %p116 = scmp.eq.s32.totalorder %s19, 1
      %p117 = por %p115, %p116
      %p119 = scmp.ne.s32.totalorder %s102, %s118
      %p120 = scmp.eq.s32.totalorder %s19, 0
      %p121 = por %p119, %p120
      %s122 = ssub.s32 %s21, %s35
      %p123 = scmp.eq.s32.totalorder %s122, 0
      %s125 = sadd.s32 %s124, 1
      %s126 = scalar_select %p123, %s124, %s125
      %p129 = pneg %p123
      %p130 = scmp.eq.s32.totalorder %s13, 1
      %p131 = por %p129, %p130
      %p132 = scmp.ne.s32.totalorder %s124, %s127
      %p133 = scmp.eq.s32.totalorder %s13, 0
      %p134 = por %p132, %p133
      %p135 = scmp.ne.s32.totalorder %s124, %s127
      %p136 = scmp.eq.s32.totalorder %s18, 1
      %p137 = por %p135, %p136
      %p138 = scmp.ne.s32.totalorder %s127, %s128
      %p139 = scmp.eq.s32.totalorder %s18, 0
      %p140 = por %p138, %p139
      %p141 = scmp.ne.s32.totalorder %s127, %s128
      %p142 = scmp.eq.s32.totalorder %s19, 1
      %p143 = por %p141, %p142
      %p145 = scmp.ne.s32.totalorder %s128, %s144
      %p146 = scmp.eq.s32.totalorder %s19, 0
      %p147 = por %p145, %p146
      %s148 = ssub.s32 %s20, %s39
      %s149 = ssub.s32 %s21, %s35
      %s150 = sor.u32 %s148, %s149
      %p151 = scmp.eq.s32.totalorder %s150, 0
      %s153 = sadd.s32 %s152, 1
      %s154 = scalar_select %p151, %s152, %s153
      %p157 = pneg %p151
      %p158 = scmp.eq.s32.totalorder %s13, 1
      %p159 = por %p157, %p158
      %p160 = scmp.ne.s32.totalorder %s152, %s155
      %p161 = scmp.eq.s32.totalorder %s13, 0
      %p162 = por %p160, %p161
      %p163 = scmp.ne.s32.totalorder %s152, %s155
      %p164 = scmp.eq.s32.totalorder %s18, 1
      %p165 = por %p163, %p164
      %p166 = scmp.ne.s32.totalorder %s155, %s156
      %p167 = scmp.eq.s32.totalorder %s18, 0
      %p168 = por %p166, %p167
      %p169 = scmp.ne.s32.totalorder %s155, %s156
      %p170 = scmp.eq.s32.totalorder %s19, 1
      %p171 = por %p169, %p170
      %p173 = scmp.ne.s32.totalorder %s156, %s172
      %p174 = scmp.eq.s32.totalorder %s19, 0
      %p175 = por %p173, %p174
      %p176 = scmp.le.s32.totalorder 1, %s13
      %p177 = scmp.lt.s32.totalorder %s13, 3
      %p178 = pnand %p176, %p177
      %p179 = pneg %p178
      // Predicated region
      $region9: #{tpu_custom_call.1} parent=5 // pred_check
        _
      $region10: #{tpu_custom_call.1} parent=5 // pred_check_branch
        %181 = sbr.rel (%p178) target = $region12
      $region11: #{tpu_custom_call.1} parent=5 // pred_region
        %s182 = ssub.s32 %s13, 1
        // Predicated region
        $region13: #{tpu_custom_call.1} parent=11 // pred_check
          %p183 = pneg %p88
        $region14: #{tpu_custom_call.1} parent=11 // pred_check_branch
          %185 = sbr.rel (%p183) target = $region16
        $region15: #{tpu_custom_call.1} parent=11 // pred_region
          %s186 = smul.u32 4, %s25
          %p187 = scmp.lt.s32.totalorder %s186, 3
          %s188 = scalar_select %p187, %s186, 3
          %p189 = scmp.lt.s32.totalorder %s24, 0
          %s190 = scalar_select %p189, %s24, 0
          %s191 = sadd.s32 %s190, %s188
          %s192 = smul.addr %s191, 4
          %s193 = scalar_lea.vmem %s1, %s192
          %s194 = smul.u32 4, %s25
        $region16: #{tpu_custom_call.1} parent=11 // pred_fallthru
          _
        // Predicated region
        $region17: #{tpu_custom_call.1} parent=11 // pred_check
          %p195 = pneg %p114
        $region18: #{tpu_custom_call.1} parent=11 // pred_check_branch
          %197 = sbr.rel (%p195) target = $region20
        $region19: #{tpu_custom_call.1} parent=11 // pred_region
          %p198 = scmp.lt.s32.totalorder %s24, 0
          %s199 = scalar_select %p198, %s24, 0
          %s200 = scalar_lea.vmem %s2, %s199
        $region20: #{tpu_custom_call.1} parent=11 // pred_fallthru
          _
        // Predicated region
        $region21: #{tpu_custom_call.1} parent=11 // pred_check
          %p201 = pneg %p140
        $region22: #{tpu_custom_call.1} parent=11 // pred_check_branch
          %203 = sbr.rel (%p201) target = $region24
        $region23: #{tpu_custom_call.1} parent=11 // pred_region
          %p204 = scmp.lt.s32.totalorder %s24, 0
          %s205 = scalar_select %p204, %s24, 0
          %s206 = scalar_lea.vmem %s3, %s205
        $region24: #{tpu_custom_call.1} parent=11 // pred_fallthru
          _
      $region12: #{tpu_custom_call.1} parent=5 // pred_fallthru
        _
      %p207 = scmp.lt.s32.totalorder %s13, 2
      // Predicated region
      $region25: #{tpu_custom_call.1} parent=5 // pred_check
        %p208 = pneg %p207
      $region26: #{tpu_custom_call.1} parent=5 // pred_check_branch
        %210 = sbr.rel (%p208) target = $region28
      $region27: #{tpu_custom_call.1} parent=5 // pred_region
        // Predicated region
        $region29: #{tpu_custom_call.1} parent=27 // pred_check
          %p211 = pneg %p54
        $region30: #{tpu_custom_call.1} parent=27 // pred_check_branch
          %213 = sbr.rel (%p211) target = $region32
        $region31: #{tpu_custom_call.1} parent=27 // pred_region
          %s214 = smul.u32 8, %s20
          %p215 = scmp.lt.s32.totalorder %s214, 15
          %s216 = scalar_select %p215, %s214, 15
          %p217 = scmp.lt.s32.totalorder %s22, 0
          %s218 = scalar_select %p217, %s22, 0
          %s219 = sadd.s32 %s218, %s216
          %s220 = smul.addr %s219, 4
          %s221 = scalar_lea.vmem %s0, %s220
          %s222 = smul.u32 8, %s20
        $region32: #{tpu_custom_call.1} parent=27 // pred_fallthru
          _
      $region28: #{tpu_custom_call.1} parent=5 // pred_fallthru
        _
      %p223 = scmp.le.s32.totalorder 1, %s13
      %p224 = scmp.lt.s32.totalorder %s13, 3
      %p225 = pnand %p223, %p224
      %p226 = pneg %p225
      // Predicated region
      $region33: #{tpu_custom_call.1} parent=5 // pred_check
        _
      $region34: #{tpu_custom_call.1} parent=5 // pred_check_branch
        %228 = sbr.rel (%p225) target = $region36
      $region35: #{tpu_custom_call.1} parent=5 // pred_region
        %s229 = ssub.s32 %s13, 1
        %s230 = smul.u32 8, %s23
        %p231 = scmp.lt.s32.totalorder %s230, 15
        %s232 = scalar_select %p231, %s230, 15
        %p233 = scmp.lt.s32.totalorder %s25, 0
        %s234 = scalar_select %p233, %s25, 0
        %s235 = sadd.s32 %s234, %s232
        %s236 = smul.addr %s235, 4
        %s237 = scalar_lea.vmem %s0, %s236
        %p238 = pneg %p60
        %p239 = pneg %p57
        %s240 = smul.u32 4, %s25
        %p241 = scmp.lt.s32.totalorder %s240, 3
        %s242 = scalar_select %p241, %s240, 3
        %p243 = scmp.lt.s32.totalorder %s24, 0
        %s244 = scalar_select %p243, %s24, 0
        %s245 = sadd.s32 %s244, %s242
        %s246 = smul.addr %s245, 4
        %s247 = scalar_lea.vmem %s1, %s246
        %p248 = pneg %p88
        %p249 = pneg %p85
        %p250 = scmp.lt.s32.totalorder %s24, 0
        %s251 = scalar_select %p250, %s24, 0
        %s252 = scalar_lea.vmem %s2, %s251
        %p253 = pneg %p114
        %p254 = pneg %p111
        %p255 = scmp.lt.s32.totalorder %s24, 0
        %s256 = scalar_select %p255, %s24, 0
        %s257 = scalar_lea.vmem %s3, %s256
        %p258 = pneg %p140
        %p259 = pneg %p137
        %p260 = pneg %p168
        %p261 = pneg %p165
        %s262 = sand.u32 %s155, 1
        %s263 = scalar_lea.sflag [#allocation4], %s262
        %s264 = sand.u32 %s155, 1
        %s265 = smul.addr %s264, 32
        %s266 = scalar_lea.vmem [#allocation3], %s265
        %s267 = smul.u32 8, %s23
        %p268 = scmp.lt.s32.totalorder %s267, 15
        %s269 = scalar_select %p268, %s267, 15
        %p270 = scmp.lt.s32.totalorder %s25, 0
        %s271 = scalar_select %p270, %s25, 0
        %s272 = sadd.s32 %s271, %s269
        %s273 = smul.addr %s272, 4
        %s274 = scalar_lea.vmem %s0, %s273
        %s275 = smul.u32 8, %s23
        %s276 = smul.u32 4, %s25
        %p277 = scmp.lt.s32.totalorder %s276, 3
        %s278 = scalar_select %p277, %s276, 3
        %p279 = scmp.lt.s32.totalorder %s24, 0
        %s280 = scalar_select %p279, %s24, 0
        %s281 = sadd.s32 %s280, %s278
        %s282 = smul.addr %s281, 4
        %s283 = scalar_lea.vmem %s1, %s282
        %s284 = smul.u32 4, %s25
        %p285 = scmp.lt.s32.totalorder %s24, 0
        %s286 = scalar_select %p285, %s24, 0
        %s287 = scalar_lea.vmem %s2, %s286
        %p288 = scmp.lt.s32.totalorder %s24, 0
        %s289 = scalar_select %p288, %s24, 0
        %s290 = scalar_lea.vmem %s3, %s289
        %s291 = smul.u32 8, %s23
        %p293 = scmp.eq.s32.totalorder %s25, 0
        // Predicated region
        $region37: #{tpu_custom_call.1} parent=35 // pred_check
          %p294 = pneg %p293
        $region38: #{tpu_custom_call.1} parent=35 // pred_check_branch
          %296 = sbr.rel (%p294) target = $region40
        $region39: #{tpu_custom_call.1} parent=35 // pred_region
          %297 = vst [vmem:[#allocation2] sm:$0xff] 0.0
          %298 = vst [vmem:[#allocation2 + $0x8] sm:$0xff] 0.0
          %299 = vst [vmem:[#allocation2 + $0x10] sm:$0xff] 0.0
          %300 = vst [vmem:[#allocation2 + $0x18] sm:$0xff] 0.0
          %301 = vst [vmem:[#allocation2 + $0x20] sm:$0xff] 0.0
          %302 = vst [vmem:[#allocation2 + $0x28] sm:$0xff] 0.0
          %303 = vst [vmem:[#allocation2 + $0x30] sm:$0xff] 0.0
          %304 = vst [vmem:[#allocation2 + $0x38] sm:$0xff] 0.0
        $region40: #{tpu_custom_call.1} parent=35 // pred_fallthru
          _
        %v305 = vld [vmem:[#allocation2] sm:$0xff]
        %v306 = vld [vmem:[#allocation2 + $0x8] sm:$0xff]
        %v307 = vld [vmem:[#allocation2 + $0x10] sm:$0xff]
        %v308 = vld [vmem:[#allocation2 + $0x18] sm:$0xff]
        %v309 = vld [vmem:[#allocation2 + $0x20] sm:$0xff]
        %v310 = vld [vmem:[#allocation2 + $0x28] sm:$0xff]
        %v311 = vld [vmem:[#allocation2 + $0x30] sm:$0xff]
        %v312 = vld [vmem:[#allocation2 + $0x38] sm:$0xff]
        %v313 = vld [vmem:[%s274] sm:$0xf]
        %v314 = vld [vmem:[%s274 + $0x4] sm:$0xf]
        %v315 = vld [vmem:[%s274 + $0x8] sm:$0xf]
        %v316 = vld [vmem:[%s274 + $0xc] sm:$0xf]
        %v317 = vld [vmem:[%s274 + $0x10] sm:$0xf]
        %v318 = vld [vmem:[%s274 + $0x14] sm:$0xf]
        %v319 = vld [vmem:[%s274 + $0x18] sm:$0xf]
        %v320 = vld [vmem:[%s274 + $0x1c] sm:$0xf]
        %v321 = vld [vmem:[%s283] sm:$0xf]
        %v322 = vld [vmem:[%s283 + $0x4] sm:$0xf]
        %v323 = vld [vmem:[%s283 + $0x8] sm:$0xf]
        %v324 = vld [vmem:[%s283 + $0xc] sm:$0x3]
        %v333 = vunpack.c.l.b16 %v313
        %v334 = vunpack.c.l.b16 %v314
        %v335 = vunpack.c.l.b16 %v315
        %v336 = vunpack.c.l.b16 %v316
        %v337 = vunpack.c.l.b16 %v317
        %v338 = vunpack.c.l.b16 %v318
        %v339 = vunpack.c.l.b16 %v319
        %v340 = vunpack.c.l.b16 %v320
        %v341 = vpack.c.b16 %v334, %v333
        %v342 = vpack.c.b16 %v336, %v335
        %v343 = vpack.c.b16 %v338, %v337
        %v344 = vpack.c.b16 %v340, %v339
        %v349 = vunpack.c.l.b16 %v321
        %v350 = vunpack.c.l.b16 %v322
        %v351 = vunpack.c.l.b16 %v323
        %v352 = vunpack.c.l.b16 %v324
        %v353 = vpack.c.b16 %v350, %v349
        %v354 = vpack.c.b16 %v352, %v351
        %vm356 = vcmask 220160
        %v358 = vsel %vm356, %v341, 0
        %v361 = vsel %vm356, %v342, 0
        %v364 = vsel %vm356, %v343, 0
        %v367 = vsel %vm356, %v344, 0
        %vm369 = vcmask 1044480
        %vm370 = vcmask 1045504
        %v371 = vsel %vm369, 4294967295, 65535
        %v372 = vsel %vm370, %v371, 0
        %v374 = vand.u32 %v354, %v372
        %376 = vmatpush.bf16.msra.mxu0 0
        %377 = vmatpush.bf16.msra.mxu0 0
        %378 = vmatpush.bf16.msra.mxu0 0
        %379 = vmatpush.bf16.msra.mxu0 0
        %380 = vmatpush.bf16.msra.mxu0 0
        %381 = vmatpush.bf16.msra.mxu0 0
        %382 = vmatpush.bf16.msra.mxu0 %v374
        %383 = vmatpush.bf16.msra.mxu0 %v353
        %384 = vmatmul.bf16.gmra.mxu0 %v358
        %v385 = vpop.f32.mrf.mxu0
        %v386 = vadd.f32 0.0, %v385
        %v387 = vpop.f32.mrf.mxu0
        %v388 = vadd.f32 0.0, %v387
        %389 = vmatmul.bf16.gmra.mxu0 %v361
        %v390 = vpop.f32.mrf.mxu0
        %v391 = vadd.f32 0.0, %v390
        %v392 = vpop.f32.mrf.mxu0
        %v393 = vadd.f32 0.0, %v392
        %394 = vmatmul.bf16.gmra.mxu0 %v364
        %v395 = vpop.f32.mrf.mxu0
        %v396 = vadd.f32 0.0, %v395
        %v397 = vpop.f32.mrf.mxu0
        %v398 = vadd.f32 0.0, %v397
        %399 = vmatmul.bf16.gmra.mxu0 %v367
        %v400 = vpop.f32.mrf.mxu0
        %v401 = vadd.f32 0.0, %v400
        %v402 = vpop.f32.mrf.mxu0
        %v403 = vadd.f32 0.0, %v402
        %404 = vdwg.mxu0
        %v405 = vadd.f32 %v305, %v386
        %v406 = vadd.f32 %v306, %v388
        %v407 = vadd.f32 %v307, %v391
        %v408 = vadd.f32 %v308, %v393
        %v409 = vadd.f32 %v309, %v396
        %v410 = vadd.f32 %v310, %v398
        %v411 = vadd.f32 %v311, %v401
        %v412 = vadd.f32 %v312, %v403
        %413 = vst [vmem:[#allocation2] sm:$0xff] %v405
        %414 = vst [vmem:[#allocation2 + $0x8] sm:$0xff] %v406
        %415 = vst [vmem:[#allocation2 + $0x10] sm:$0xff] %v407
        %416 = vst [vmem:[#allocation2 + $0x18] sm:$0xff] %v408
        %417 = vst [vmem:[#allocation2 + $0x20] sm:$0xff] %v409
        %418 = vst [vmem:[#allocation2 + $0x28] sm:$0xff] %v410
        %419 = vst [vmem:[#allocation2 + $0x30] sm:$0xff] %v411
        %420 = vst [vmem:[#allocation2 + $0x38] sm:$0xff] %v412
        // Predicated region
        $region41: #{tpu_custom_call.1} parent=35 // pred_check
          %p421 = pneg %p293
        $region42: #{tpu_custom_call.1} parent=35 // pred_check_branch
          %423 = sbr.rel (%p421) target = $region44
        $region43: #{tpu_custom_call.1} parent=35 // pred_region
          %v424 = vld [vmem:[#allocation2] sm:$0xff]
          %v425 = vld [vmem:[#allocation2 + $0x8] sm:$0xff]
          %v426 = vld [vmem:[#allocation2 + $0x10] sm:$0xff]
          %v427 = vld [vmem:[#allocation2 + $0x18] sm:$0xff]
          %v428 = vld [vmem:[#allocation2 + $0x20] sm:$0xff]
          %v429 = vld [vmem:[#allocation2 + $0x28] sm:$0xff]
          %v430 = vld [vmem:[#allocation2 + $0x30] sm:$0xff]
          %v431 = vld [vmem:[#allocation2 + $0x38] sm:$0xff]
          %v432 = vld [vmem:[%s287] sm:$0x1]
          %v434 = vperm.slane %v432, 0
          %v436 = vmul.f32 %v424, %v434
          %v437 = vmul.f32 %v425, %v434
          %v438 = vmul.f32 %v426, %v434
          %v439 = vmul.f32 %v427, %v434
          %v440 = vmul.f32 %v428, %v434
          %v441 = vmul.f32 %v429, %v434
          %v442 = vmul.f32 %v430, %v434
          %v443 = vmul.f32 %v431, %v434
          %v444 = vld [vmem:[%s290] sm:$0x1]
          %v446 = vperm.slane %v444, 0
          %v448 = vadd.f32 %v436, %v446
          %v449 = vadd.f32 %v437, %v446
          %v450 = vadd.f32 %v438, %v446
          %v451 = vadd.f32 %v439, %v446
          %v452 = vadd.f32 %v440, %v446
          %v453 = vadd.f32 %v441, %v446
          %v454 = vadd.f32 %v442, %v446
          %v455 = vadd.f32 %v443, %v446
          %v456 = vxor.u32 %v448, 2147483648
          %v457 = vxor.u32 %v449, 2147483648
          %v458 = vxor.u32 %v450, 2147483648
          %v459 = vxor.u32 %v451, 2147483648
          %v460 = vxor.u32 %v452, 2147483648
          %v461 = vxor.u32 %v453, 2147483648
          %v462 = vxor.u32 %v454, 2147483648
          %v463 = vxor.u32 %v455, 2147483648
          %v464 = vmul.f32 %v456, 1.442695
          %v465 = vpow.pop %v464
          %v466 = vmul.f32 %v457, 1.442695
          %v467 = vpow.pop %v466
          %v468 = vmul.f32 %v458, 1.442695
          %v469 = vpow.pop %v468
          %v470 = vmul.f32 %v459, 1.442695
          %v471 = vpow.pop %v470
          %v472 = vmul.f32 %v460, 1.442695
          %v473 = vpow.pop %v472
          %v474 = vmul.f32 %v461, 1.442695
          %v475 = vpow.pop %v474
          %v476 = vmul.f32 %v462, 1.442695
          %v477 = vpow.pop %v476
          %v478 = vmul.f32 %v463, 1.442695
          %v479 = vpow.pop %v478
          %v480 = vadd.f32 %v465, 1.0
          %v481 = vadd.f32 %v467, 1.0
          %v482 = vadd.f32 %v469, 1.0
          %v483 = vadd.f32 %v471, 1.0
          %v484 = vadd.f32 %v473, 1.0
          %v485 = vadd.f32 %v475, 1.0
          %v486 = vadd.f32 %v477, 1.0
          %v487 = vadd.f32 %v479, 1.0
          %v488 = vrcp.pop %v480
          %v489 = vmul.f32 %v480, %v488
          %v490 = vsub.f32 1.0, %v489
          %v491 = vmul.f32 %v488, %v490
          %v492 = vadd.f32 %v488, %v491
          %vm493 = vweird.f32 %v480
          %vm494 = vweird.f32 %v488
          %vm495 = vmor %vm493, %vm494
          %v496 = vsel %vm495, %v488, %v492
          %v497 = vand.u32 2147483647, %v480
          %vm498 = vcmp.eq.f32.partialorder %v497, 8.507059e+37
          %v499 = vand.u32 %v480, 2147483648
          %v500 = vor.u32 1.1754944e-38, %v499
          %v501 = vsel %vm498, %v500, %v496
          %v502 = vmul.f32 1.0, %v501
          %v503 = vrcp.pop %v481
          %v504 = vmul.f32 %v481, %v503
          %v505 = vsub.f32 1.0, %v504
          %v506 = vmul.f32 %v503, %v505
          %v507 = vadd.f32 %v503, %v506
          %vm508 = vweird.f32 %v481
          %vm509 = vweird.f32 %v503
          %vm510 = vmor %vm508, %vm509
          %v511 = vsel %vm510, %v503, %v507
          %v512 = vand.u32 2147483647, %v481
          %vm513 = vcmp.eq.f32.partialorder %v512, 8.507059e+37
          %v514 = vand.u32 %v481, 2147483648
          %v515 = vor.u32 1.1754944e-38, %v514
          %v516 = vsel %vm513, %v515, %v511
          %v517 = vmul.f32 1.0, %v516
          %v518 = vrcp.pop %v482
          %v519 = vmul.f32 %v482, %v518
          %v520 = vsub.f32 1.0, %v519
          %v521 = vmul.f32 %v518, %v520
          %v522 = vadd.f32 %v518, %v521
          %vm523 = vweird.f32 %v482
          %vm524 = vweird.f32 %v518
          %vm525 = vmor %vm523, %vm524
          %v526 = vsel %vm525, %v518, %v522
          %v527 = vand.u32 2147483647, %v482
          %vm528 = vcmp.eq.f32.partialorder %v527, 8.507059e+37
          %v529 = vand.u32 %v482, 2147483648
          %v530 = vor.u32 1.1754944e-38, %v529
          %v531 = vsel %vm528, %v530, %v526
          %v532 = vmul.f32 1.0, %v531
          %v533 = vrcp.pop %v483
          %v534 = vmul.f32 %v483, %v533
          %v535 = vsub.f32 1.0, %v534
          %v536 = vmul.f32 %v533, %v535
          %v537 = vadd.f32 %v533, %v536
          %vm538 = vweird.f32 %v483
          %vm539 = vweird.f32 %v533
          %vm540 = vmor %vm538, %vm539
          %v541 = vsel %vm540, %v533, %v537
          %v542 = vand.u32 2147483647, %v483
          %vm543 = vcmp.eq.f32.partialorder %v542, 8.507059e+37
          %v544 = vand.u32 %v483, 2147483648
          %v545 = vor.u32 1.1754944e-38, %v544
          %v546 = vsel %vm543, %v545, %v541
          %v547 = vmul.f32 1.0, %v546
          %v548 = vrcp.pop %v484
          %v549 = vmul.f32 %v484, %v548
          %v550 = vsub.f32 1.0, %v549
          %v551 = vmul.f32 %v548, %v550
          %v552 = vadd.f32 %v548, %v551
          %vm553 = vweird.f32 %v484
          %vm554 = vweird.f32 %v548
          %vm555 = vmor %vm553, %vm554
          %v556 = vsel %vm555, %v548, %v552
          %v557 = vand.u32 2147483647, %v484
          %vm558 = vcmp.eq.f32.partialorder %v557, 8.507059e+37
          %v559 = vand.u32 %v484, 2147483648
          %v560 = vor.u32 1.1754944e-38, %v559
          %v561 = vsel %vm558, %v560, %v556
          %v562 = vmul.f32 1.0, %v561
          %v563 = vrcp.pop %v485
          %v564 = vmul.f32 %v485, %v563
          %v565 = vsub.f32 1.0, %v564
          %v566 = vmul.f32 %v563, %v565
          %v567 = vadd.f32 %v563, %v566
          %vm568 = vweird.f32 %v485
          %vm569 = vweird.f32 %v563
          %vm570 = vmor %vm568, %vm569
          %v571 = vsel %vm570, %v563, %v567
          %v572 = vand.u32 2147483647, %v485
          %vm573 = vcmp.eq.f32.partialorder %v572, 8.507059e+37
          %v574 = vand.u32 %v485, 2147483648
          %v575 = vor.u32 1.1754944e-38, %v574
          %v576 = vsel %vm573, %v575, %v571
          %v577 = vmul.f32 1.0, %v576
          %v578 = vrcp.pop %v486
          %v579 = vmul.f32 %v486, %v578
          %v580 = vsub.f32 1.0, %v579
          %v581 = vmul.f32 %v578, %v580
          %v582 = vadd.f32 %v578, %v581
          %vm583 = vweird.f32 %v486
          %vm584 = vweird.f32 %v578
          %vm585 = vmor %vm583, %vm584
          %v586 = vsel %vm585, %v578, %v582
          %v587 = vand.u32 2147483647, %v486
          %vm588 = vcmp.eq.f32.partialorder %v587, 8.507059e+37
          %v589 = vand.u32 %v486, 2147483648
          %v590 = vor.u32 1.1754944e-38, %v589
          %v591 = vsel %vm588, %v590, %v586
          %v592 = vmul.f32 1.0, %v591
          %v593 = vrcp.pop %v487
          %v594 = vmul.f32 %v487, %v593
          %v595 = vsub.f32 1.0, %v594
          %v596 = vmul.f32 %v593, %v595
          %v597 = vadd.f32 %v593, %v596
          %vm598 = vweird.f32 %v487
          %vm599 = vweird.f32 %v593
          %vm600 = vmor %vm598, %vm599
          %v601 = vsel %vm600, %v593, %v597
          %v602 = vand.u32 2147483647, %v487
          %vm603 = vcmp.eq.f32.partialorder %v602, 8.507059e+37
          %v604 = vand.u32 %v487, 2147483648
          %v605 = vor.u32 1.1754944e-38, %v604
          %v606 = vsel %vm603, %v605, %v601
          %v607 = vmul.f32 1.0, %v606
          %v608 = vmul.f32 %v448, %v502
          %v609 = vmul.f32 %v449, %v517
          %v610 = vmul.f32 %v450, %v532
          %v611 = vmul.f32 %v451, %v547
          %v612 = vmul.f32 %v452, %v562
          %v613 = vmul.f32 %v453, %v577
          %v614 = vmul.f32 %v454, %v592
          %v615 = vmul.f32 %v455, %v607
          %v616 = vpack.c.bf16 %v608, %v608
          %v617 = vpack.c.bf16 %v609, %v609
          %v618 = vpack.c.bf16 %v610, %v610
          %v619 = vpack.c.bf16 %v611, %v611
          %v620 = vpack.c.bf16 %v612, %v612
          %v621 = vpack.c.bf16 %v613, %v613
          %v622 = vpack.c.bf16 %v614, %v614
          %v623 = vpack.c.bf16 %v615, %v615
          %624 = vst [vmem:[%s266] sm:$0xf] %v616
          %625 = vst [vmem:[%s266 + $0x4] sm:$0xf] %v617
          %626 = vst [vmem:[%s266 + $0x8] sm:$0xf] %v618
          %627 = vst [vmem:[%s266 + $0xc] sm:$0xf] %v619
          %628 = vst [vmem:[%s266 + $0x10] sm:$0xf] %v620
          %629 = vst [vmem:[%s266 + $0x14] sm:$0xf] %v621
          %630 = vst [vmem:[%s266 + $0x18] sm:$0xf] %v622
          %631 = vst [vmem:[%s266 + $0x1c] sm:$0xf] %v623
        $region44: #{tpu_custom_call.1} parent=35 // pred_fallthru
          _
        %s632 = sand.u32 %s155, 1
        %s633 = scalar_lea.sflag [#allocation4], %s632
        %s634 = sand.u32 %s155, 1
        %s635 = smul.addr %s634, 32
        %s636 = scalar_lea.vmem [#allocation3], %s635
        // Predicated region
        $region45: #{tpu_custom_call.1} parent=35 // pred_check
          %p637 = pneg %p165
        $region46: #{tpu_custom_call.1} parent=35 // pred_check_branch
          %639 = sbr.rel (%p637) target = $region48
        $region47: #{tpu_custom_call.1} parent=35 // pred_region
          %s640 = smul.u32 8, %s23
          %642 = vsyncadd %s633, 0
          %s643 = sadd.s32 %s24, %s640
          %s644 = smul.addr %s643, 4
          %s645 = scalar_lea.hbm %s4, %s644
          %s646 = sshll.u32 %s636, 4
          %s647 = int_to_ptr.vmem [resolvable:$true] %s646
          %s648 = sshll.u32 %s645, 4
          %s649 = int_to_ptr.hbm [resolvable:$true] %s648
          %654 = dma.vmem_to_hbm [thread:$0]  %s647, 512, %s649, %s633, 64, 64, 4
        $region48: #{tpu_custom_call.1} parent=35 // pred_fallthru
          _
      $region36: #{tpu_custom_call.1} parent=5 // pred_fallthru
        _
      %p655 = scmp.le.s32.totalorder 2, %s13
      // Predicated region
      $region49: #{tpu_custom_call.1} parent=5 // pred_check
        %p656 = pneg %p655
      $region50: #{tpu_custom_call.1} parent=5 // pred_check_branch
        %658 = sbr.rel (%p656) target = $region52
      $region51: #{tpu_custom_call.1} parent=5 // pred_region
        %s659 = ssub.s32 %s13, 2
        // Predicated region
        $region53: #{tpu_custom_call.1} parent=51 // pred_check
          %p660 = pneg %p171
        $region54: #{tpu_custom_call.1} parent=51 // pred_check_branch
          %662 = sbr.rel (%p660) target = $region56
        $region55: #{tpu_custom_call.1} parent=51 // pred_region
          %s663 = sand.u32 %s156, 1
          %s664 = scalar_lea.sflag [#allocation4], %s663
          %s665 = sand.u32 %s156, 1
          %s666 = smul.addr %s665, 32
          %s667 = scalar_lea.vmem [#allocation3], %s666
          %669 = dma.done %s664, 512
        $region56: #{tpu_custom_call.1} parent=51 // pred_fallthru
          _
      $region52: #{tpu_custom_call.1} parent=5 // pred_fallthru
        _
    $region6: #{tpu_custom_call.1} parent=1 // loop_footer
      %s17 = sadd.s32 1, %s13
    $region7: #{tpu_custom_call.1} parent=1 // loop_footer_branch
      %12 = sbr.rel target = $region3
    $region8: #{tpu_custom_call.1} parent=1 // loop_exit
      _
    %670 = vsyncpa [#allocation4], 1
    %s671 = scalar_lea.sflag [#allocation4], 1
    %672 = vsyncpa %s671, 1

</llo_original>
